<compile_context>
chip_gen: v7x
topology: tpu7x:2x2x1
jax: 0.10.0
libtpu: 0.0.40
codegen_flags: <defaults>
</compile_context>

<pallas_src>
import jax
import jax.numpy as jnp
from jax.experimental import pallas as pl
from jax.experimental.pallas import tpu as pltpu

HIDDEN = 256
NUM_ACT = 3


def _round_up(x, m):
    return ((x + m - 1) // m) * m


def _cdiv(a, b):
    return (a + b - 1) // b


def action_kernel(h_ref, wt_ref, b_ref, u_ref, out_ref):
    # bf16 operands into the MXU, f32 accumulation.
    h = h_ref[...].astype(jnp.bfloat16)        # (TB, 256)
    wt = wt_ref[...].astype(jnp.bfloat16)      # (3, 256)

    # (3,256) contracted with (TB,256) on the feature axis -> (3, TB):
    # logits land lane-dense over the batch axis (standard NT/attention form).
    logits = jax.lax.dot_general(
        wt, h, (((1,), (1,)), ((), ())),
        preferred_element_type=jnp.float32) + b_ref[...]        # (3, TB)

    l0 = logits[0:1, :]
    l1 = logits[1:2, :]
    l2 = logits[2:3, :]

    # Numerically stable 3-way elementwise softmax: no cross-lane reductions,
    # no divides anywhere.
    m = jnp.maximum(jnp.maximum(l0, l1), l2)                    # (1, TB)
    e0 = jnp.exp(l0 - m)
    e1 = jnp.exp(l1 - m)
    e2 = jnp.exp(l2 - m)
    s = e0 + e1 + e2                                            # (1, TB)
    logs = jnp.log(s)
    lp0 = (l0 - m) - logs
    lp1 = (l1 - m) - logs
    lp2 = (l2 - m) - logs

    # Categorical sample via inverse CDF on the UNNORMALIZED cumulative sums:
    # u ~ U[0,1)  =>  compare u*s against cumulative exponentials.
    us = u_ref[...] * s                                         # (1, TB)
    c0 = e0
    c1 = e0 + e1
    a = (us >= c0).astype(jnp.int32) + (us >= c1).astype(jnp.int32)  # {0,1,2}

    # log-prob of the sampled action: two elementwise selects (VALU, no XLU).
    logpi = jnp.where(a == 0, lp0, jnp.where(a == 1, lp1, lp2))  # (1, TB)

    # Single lane-dense (2, TB) store: row 0 = logpi, row 1 = (a - 1).
    out_ref[...] = jnp.concatenate(
        [logpi, (a - 1).astype(jnp.float32)], axis=0)


def action_forward(h, w, b, u, *, tb=4096):
    """h: (B, 256) f32, w: (256, 3) f32, b: (3,) f32, u: (B,) f32 uniforms in [0,1).

    Returns (logpi, a - 1) with shapes ((B,), (B,)).
    """
    B = h.shape[0]
    assert B >= 1
    B8 = _round_up(B, 8)

    # Block count: amortize per-step overhead with big tiles, but keep >= 2
    # blocks at moderate B so the "parallel" axis shards across both v7x TCs.
    grid_n = _cdiv(B8, tb)
    if grid_n == 1 and B8 >= 2048:
        grid_n = 2
    if grid_n == 1:
        TB = B8                                   # block == full array dims
    else:
        TB = _round_up(_cdiv(B8, grid_n), 128)    # lane-axis tiles need 128-mult
    B_pad = grid_n * TB

    if B_pad != B:
        h = jnp.pad(h, ((0, B_pad - B), (0, 0)))
    u2 = u.reshape(1, B)
    if B_pad != B:
        u2 = jnp.pad(u2, ((0, 0), (0, B_pad - B)), constant_values=0.5)

    wt = w.T                          # (3, 256): tiny, transposed once on host
    b2 = b.reshape(NUM_ACT, 1)        # broadcast over lanes inside the kernel

    out = pl.pallas_call(
        action_kernel,
        out_shape=jax.ShapeDtypeStruct((2, B_pad), jnp.float32),
        grid_spec=pltpu.PrefetchScalarGridSpec(
            num_scalar_prefetch=0,
            grid=(grid_n,),
            in_specs=[
                pl.BlockSpec((TB, HIDDEN), lambda i: (i, 0)),       # h: tiled batch
                pl.BlockSpec((NUM_ACT, HIDDEN), lambda i: (0, 0)),  # w^T: replicated
                pl.BlockSpec((NUM_ACT, 1), lambda i: (0, 0)),       # bias: replicated
                pl.BlockSpec((1, TB), lambda i: (0, i)),            # uniforms: lane-dense
            ],
            out_specs=pl.BlockSpec((2, TB), lambda i: (0, i)),      # packed, lane-dense
        ),
        compiler_params=pltpu.CompilerParams(
            dimension_semantics=("parallel",),
            # TB=4096 f32 h tile is 4 MiB per buffer (8 MiB double-buffered):
            # fits v5e's SRAM with this explicit limit and v7x's 64 MiB physical.
            vmem_limit_bytes=32 * 1024 * 1024,
        ),
    )(h, wt, b2, u2)

    logpi = out[0, :B]
    a_minus1 = out[1, :B].astype(jnp.int32)
    return logpi, a_minus1


if __name__ == "__main__":
    key = jax.random.PRNGKey(0)
    k_h, k_w, k_b, k_u = jax.random.split(key, 4)

    B = 8
    h = jax.random.normal(k_h, (B, HIDDEN), dtype=jnp.float32)

    # nn.Linear default init scale: U(-1/sqrt(fan_in), 1/sqrt(fan_in)).
    bound = 1.0 / (HIDDEN ** 0.5)
    w = jax.random.uniform(k_w, (HIDDEN, NUM_ACT), minval=-bound, maxval=bound,
                           dtype=jnp.float32)
    b = jax.random.uniform(k_b, (NUM_ACT,), minval=-bound, maxval=bound,
                           dtype=jnp.float32)

    # Host-supplied uniforms drive the Categorical sample inside the kernel.
    u = jax.random.uniform(k_u, (B,), dtype=jnp.float32)

    logpi, act = action_forward(h, w, b, u)
    jax.block_until_ready((logpi, act))

    # Basic invariants.
    assert logpi.shape == (B,) and act.shape == (B,)
    assert bool(jnp.all(logpi <= 0.0))
    assert bool(jnp.all((act >= -1) & (act <= 1)))

    # Pure-JAX reference with the same bf16 MXU feed and the same uniforms.
    logits_ref = jnp.dot(h.astype(jnp.bfloat16), w.astype(jnp.bfloat16),
                         preferred_element_type=jnp.float32) + b
    m_ref = jnp.max(logits_ref, axis=1, keepdims=True)
    e_ref = jnp.exp(logits_ref - m_ref)
    s_ref = jnp.sum(e_ref, axis=1, keepdims=True)
    logp_ref = (logits_ref - m_ref) - jnp.log(s_ref)
    us_ref = u[:, None] * s_ref
    a_ref = ((us_ref >= e_ref[:, 0:1]).astype(jnp.int32)
             + (us_ref >= (e_ref[:, 0:1] + e_ref[:, 1:2])).astype(jnp.int32))[:, 0]
    logpi_ref = jnp.take_along_axis(logp_ref, a_ref[:, None], axis=1)[:, 0]

    assert bool(jnp.all(act == a_ref - 1))
    assert bool(jnp.allclose(logpi, logpi_ref, atol=5e-3, rtol=0.0))

    print("KERNEL_OK")
</pallas_src>

<mosaic_0001>
module attributes {stable_mosaic.version = 11 : i64} {
  func.func @action_kernel(%arg0: i32, %arg1: memref<8x256xf32, #tpu.memory_space<vmem>>, %arg2: memref<3x256xf32, #tpu.memory_space<vmem>>, %arg3: memref<3x1xf32, #tpu.memory_space<vmem>>, %arg4: memref<1x8xf32, #tpu.memory_space<vmem>>, %arg5: memref<2x8xf32, #tpu.memory_space<vmem>>) attributes {dimension_semantics = [#tpu.dimension_semantics<parallel>], iteration_bounds = array<i64: 1>, scalar_prefetch = 0 : i64, scratch_operands = 0 : i64, tpu.core_type = #tpu.core_type<tc>, window_params = [{transform_indices = @transform_0, window_bounds = array<i64: 8, 256>}, {pipeline_mode = #tpu.pipeline_mode<synchronous>, transform_indices = @transform_1, window_bounds = array<i64: 3, 256>}, {pipeline_mode = #tpu.pipeline_mode<synchronous>, transform_indices = @transform_2, window_bounds = array<i64: 3, 1>}, {transform_indices = @transform_3, window_bounds = array<i64: 1, 8>}, {transform_indices = @transform_4, window_bounds = array<i64: 2, 8>}]} {
    %c0 = arith.constant 0 : index
    %c0_0 = arith.constant 0 : index
    %0 = vector.load %arg1[%c0, %c0_0] : memref<8x256xf32, #tpu.memory_space<vmem>>, vector<8x256xf32>
    %1 = arith.truncf %0 : vector<8x256xf32> to vector<8x256xbf16>
    %c0_1 = arith.constant 0 : index
    %c0_2 = arith.constant 0 : index
    %2 = vector.load %arg2[%c0_1, %c0_2] : memref<3x256xf32, #tpu.memory_space<vmem>>, vector<3x256xf32>
    %3 = arith.truncf %2 : vector<3x256xf32> to vector<3x256xbf16>
    %cst = arith.constant dense<0.000000e+00> : vector<3x8xf32>
    %4 = tpu.matmul %3, %1, %cst {dimension_numbers = #tpu.dot_dimension_numbers<[1], [1], [0], [0], [0, 0, 1, 0], [], []>} : vector<3x256xbf16>, vector<8x256xbf16>, vector<3x8xf32> -> vector<3x8xf32>
    %c0_3 = arith.constant 0 : index
    %c0_4 = arith.constant 0 : index
    %5 = vector.load %arg3[%c0_3, %c0_4] : memref<3x1xf32, #tpu.memory_space<vmem>>, vector<3x1xf32>
    %6 = vector.broadcast %5 : vector<3x1xf32> to vector<3x8xf32>
    %7 = arith.addf %4, %6 : vector<3x8xf32>
    %8 = vector.extract_strided_slice %7 {offsets = [0, 0], sizes = [1, 8], strides = [1, 1]} : vector<3x8xf32> to vector<1x8xf32>
    %9 = vector.extract_strided_slice %7 {offsets = [1, 0], sizes = [1, 8], strides = [1, 1]} : vector<3x8xf32> to vector<1x8xf32>
    %10 = vector.extract_strided_slice %7 {offsets = [2, 0], sizes = [1, 8], strides = [1, 1]} : vector<3x8xf32> to vector<1x8xf32>
    %11 = arith.maximumf %8, %9 : vector<1x8xf32>
    %12 = arith.maximumf %11, %10 : vector<1x8xf32>
    %13 = arith.subf %8, %12 : vector<1x8xf32>
    %14 = math.exp %13 : vector<1x8xf32>
    %15 = arith.subf %9, %12 : vector<1x8xf32>
    %16 = math.exp %15 : vector<1x8xf32>
    %17 = arith.subf %10, %12 : vector<1x8xf32>
    %18 = math.exp %17 : vector<1x8xf32>
    %19 = arith.addf %14, %16 : vector<1x8xf32>
    %20 = arith.addf %19, %18 : vector<1x8xf32>
    %21 = math.log %20 : vector<1x8xf32>
    %22 = arith.subf %8, %12 : vector<1x8xf32>
    %23 = arith.subf %22, %21 : vector<1x8xf32>
    %24 = arith.subf %9, %12 : vector<1x8xf32>
    %25 = arith.subf %24, %21 : vector<1x8xf32>
    %26 = arith.subf %10, %12 : vector<1x8xf32>
    %27 = arith.subf %26, %21 : vector<1x8xf32>
    %c0_5 = arith.constant 0 : index
    %c0_6 = arith.constant 0 : index
    %28 = vector.load %arg4[%c0_5, %c0_6] : memref<1x8xf32, #tpu.memory_space<vmem>>, vector<1x8xf32>
    %29 = arith.mulf %28, %20 : vector<1x8xf32>
    %30 = arith.addf %14, %16 : vector<1x8xf32>
    %31 = arith.cmpf oge, %29, %14 : vector<1x8xf32>
    %32 = arith.extui %31 : vector<1x8xi1> to vector<1x8xi32>
    %33 = arith.cmpf oge, %29, %30 : vector<1x8xf32>
    %34 = arith.extui %33 : vector<1x8xi1> to vector<1x8xi32>
    %35 = arith.addi %32, %34 : vector<1x8xi32>
    %c0_i32 = arith.constant 0 : i32
    %36 = vector.broadcast %c0_i32 : i32 to vector<1x8xi32>
    %37 = arith.cmpi eq, %35, %36 : vector<1x8xi32>
    %c1_i32 = arith.constant 1 : i32
    %38 = vector.broadcast %c1_i32 : i32 to vector<1x8xi32>
    %39 = arith.cmpi eq, %35, %38 : vector<1x8xi32>
    %40 = arith.select %39, %25, %27 : vector<1x8xi1>, vector<1x8xf32>
    %41 = arith.select %37, %23, %40 : vector<1x8xi1>, vector<1x8xf32>
    %c1_i32_7 = arith.constant 1 : i32
    %42 = vector.broadcast %c1_i32_7 : i32 to vector<1x8xi32>
    %43 = arith.subi %35, %42 : vector<1x8xi32>
    %44 = arith.sitofp %43 : vector<1x8xi32> to vector<1x8xf32>
    %45 = tpu.concatenate %41, %44 in 0 : vector<1x8xf32>, vector<1x8xf32> -> vector<2x8xf32>
    %c0_8 = arith.constant 0 : index
    %c0_9 = arith.constant 0 : index
    %46 = vector.load %arg5[%c0_8, %c0_9] : memref<2x8xf32, #tpu.memory_space<vmem>>, vector<2x8xf32>
    tpu.vector_store %arg5[%c0_8, %c0_9], %45 {strides = array<i32>} : memref<2x8xf32, #tpu.memory_space<vmem>>, vector<2x8xf32>,
    return
  }
  func.func @transform_0(%arg0: i32) -> (i32, i32) {
    %c0_i32 = arith.constant 0 : i32
    %c0_i32_0 = arith.constant 0 : i32
    return %arg0, %c0_i32 : i32, i32
  }
  func.func @transform_1(%arg0: i32) -> (i32, i32) {
    %c0_i32 = arith.constant 0 : i32
    %c0_i32_0 = arith.constant 0 : i32
    %c0_i32_1 = arith.constant 0 : i32
    return %c0_i32, %c0_i32_0 : i32, i32
  }
  func.func @transform_2(%arg0: i32) -> (i32, i32) {
    %c0_i32 = arith.constant 0 : i32
    %c0_i32_0 = arith.constant 0 : i32
    %c0_i32_1 = arith.constant 0 : i32
    return %c0_i32, %c0_i32_0 : i32, i32
  }
  func.func @transform_3(%arg0: i32) -> (i32, i32) {
    %c0_i32 = arith.constant 0 : i32
    %c0_i32_0 = arith.constant 0 : i32
    return %c0_i32, %arg0 : i32, i32
  }
  func.func @transform_4(%arg0: i32) -> (i32, i32) {
    %c0_i32 = arith.constant 0 : i32
    %c0_i32_0 = arith.constant 0 : i32
    return %c0_i32, %arg0 : i32, i32
  }
}

</mosaic_0001>

<llo_original>
// kernel: tpu_custom_call.1
$region0: #{tpu_custom_call.1}
  #allocation0 [shape = 'u32[]', space=smem, size = 0x4, offset = 0x4, fixed_abs, tag = 'smem constant byte address 0x4 - core index']
  #allocation1 [shape = 'u32[144,128]{1,0:T(1,128)}', space=vmem, size = 0x12000, scoped, tag = 'internal scratch']
  %s0 = inlined_call_operand.hbm [shape: f32[8,256], index: 0, kind: input, shape index: {}]
  %s1 = inlined_call_operand.vmem [shape: f32[3,256], index: 1, kind: input, shape index: {}]
  %s2 = inlined_call_operand.vmem [shape: f32[3,1], index: 2, kind: input, shape index: {}]
  %s3 = inlined_call_operand.vmem [shape: f32[1,8], index: 3, kind: input, shape index: {}]
  %s4 = inlined_call_operand.hbm [shape: f32[2,8], index: 4, kind: output, shape index: {}]
  %s5 = sld [smem:[#allocation0]]
  $region30: #{tpu_custom_call.1} parent=0
    _
  %s7 = ssub.s32 1, %s5
  %s8 = scalar_select 0, %s7, %s5
  $region1: #{tpu_custom_call.1} parent=0
    #allocation2 [shape = 'u8[8192]{0}', space=vmem, size = 0x2000, scoped, tag = 'input window, operand 0, single buffered']
    #allocation3 [shape = 's32[1]{0}', space=sflag, size = 0x4, scoped, tag = 'scoped memory for tpu_custom_call.1']
    #allocation4 [shape = 's32[1]{0}', space=sflag, size = 0x4, scoped, tag = 'scoped memory for tpu_custom_call.1']
    #allocation5 [shape = 'u8[1024]{0}', space=vmem, size = 0x400, scoped, tag = 'output window, operand 0, single buffered']
    %9 = vsyncpa [#allocation3], 0
    %10 = vsyncpa [#allocation4], 0
    // Predicated region
    $region2: #{tpu_custom_call.1} parent=1 // pred_check
      _
    $region3: #{tpu_custom_call.1} parent=1 // pred_check_branch
      %12 = sbr.rel (0) target = $region5
    $region4: #{tpu_custom_call.1} parent=1 // pred_region
      %s14 = ssub.s32 256, 256
      %15 = vsyncadd [#allocation3], %s14
      %s17 = sshll.u32 [#allocation2], 4
      %s18 = int_to_ptr.vmem [resolvable:$true] %s17
      %20 = dma.hbm_to_vmem [thread:$0]  %s0, 256, %s18, [#allocation3]
    $region5: #{tpu_custom_call.1} parent=1 // pred_fallthru
      _
    // Predicated region
    $region6: #{tpu_custom_call.1} parent=1 // pred_check
      _
    $region7: #{tpu_custom_call.1} parent=1 // pred_check_branch
      %22 = sbr.rel (0) target = $region9
    $region8: #{tpu_custom_call.1} parent=1 // pred_region
      _
    $region9: #{tpu_custom_call.1} parent=1 // pred_fallthru
      _
    // Predicated region
    $region10: #{tpu_custom_call.1} parent=1 // pred_check
      _
    $region11: #{tpu_custom_call.1} parent=1 // pred_check_branch
      %24 = sbr.rel (0) target = $region13
    $region12: #{tpu_custom_call.1} parent=1 // pred_region
      _
    $region13: #{tpu_custom_call.1} parent=1 // pred_fallthru
      _
    // Predicated region
    $region14: #{tpu_custom_call.1} parent=1 // pred_check
      _
    $region15: #{tpu_custom_call.1} parent=1 // pred_check_branch
      %26 = sbr.rel (0) target = $region17
    $region16: #{tpu_custom_call.1} parent=1 // pred_region
      _
    $region17: #{tpu_custom_call.1} parent=1 // pred_fallthru
      _
    // Predicated region
    $region18: #{tpu_custom_call.1} parent=1 // pred_check
      _
    $region19: #{tpu_custom_call.1} parent=1 // pred_check_branch
      %28 = sbr.rel (0) target = $region21
    $region20: #{tpu_custom_call.1} parent=1 // pred_region
      %29 = dma.done [#allocation3], 256
    $region21: #{tpu_custom_call.1} parent=1 // pred_fallthru
      _
    %v31 = vld [vmem:[#allocation2] sm:$0xff]
    %v32 = vld [vmem:[#allocation2 + $0x8] sm:$0xff]
    %v33 = vpack.c.bf16 %v31, %v31
    %v34 = vpack.c.bf16 %v32, %v32
    %v35 = vld [vmem:[%s1] sm:$0x77]
    %v37 = vcombine.high %v35, %v35
    %v39 = vpack.c.bf16 %v35, %v35
    %v40 = vpack.c.bf16 %v37, %v37
    %v41 = vld [vmem:[%s2] sm:$0x7]
    %43 = vset.pattern.permute.xlu0 0
    %44 = vperm.xlu0 %43, %v41
    %v45 = vpop.permute.xlu0 %44
    %47 = vmatprep.subr.bf16.mxu0 %v34
    %48 = vmatpush1.bf16.xpose.msra.mxu0 %v33
    %49 = vmatprep.subr.bf16.mxu0 0
    %50 = vmatpush1.bf16.xpose.msra.mxu0 0
    %51 = vmatprep.subr.bf16.mxu0 0
    %52 = vmatpush1.bf16.xpose.msra.mxu0 0
    %53 = vmatprep.subr.bf16.mxu0 0
    %54 = vmatpush1.bf16.xpose.msra.mxu0 0
    %55 = vmatprep.subr.bf16.mxu0 0
    %56 = vmatpush1.bf16.xpose.msra.mxu0 0
    %57 = vmatprep.subr.bf16.mxu0 0
    %58 = vmatpush1.bf16.xpose.msra.mxu0 0
    %59 = vmatprep.subr.bf16.mxu0 0
    %60 = vmatpush1.bf16.xpose.msra.mxu0 0
    %61 = vmatprep.subr.bf16.mxu0 0
    %62 = vmatpush1.bf16.xpose.msra.mxu0 0
    %63 = vmatprep.subr.bf16.mxu0 0
    %64 = vmatpush1.bf16.xpose.msra.mxu0 0
    %65 = vmatprep.subr.bf16.mxu0 0
    %66 = vmatpush1.bf16.xpose.msra.mxu0 0
    %67 = vmatprep.subr.bf16.mxu0 0
    %68 = vmatpush1.bf16.xpose.msra.mxu0 0
    %69 = vmatprep.subr.bf16.mxu0 0
    %70 = vmatpush1.bf16.xpose.msra.mxu0 0
    %71 = vmatprep.subr.bf16.mxu0 0
    %72 = vmatpush1.bf16.xpose.msra.mxu0 0
    %73 = vmatprep.subr.bf16.mxu0 0
    %74 = vmatpush1.bf16.xpose.msra.mxu0 0
    %75 = vmatprep.subr.bf16.mxu0 0
    %76 = vmatpush1.bf16.xpose.msra.mxu0 0
    %77 = vmatprep.subr.bf16.mxu0 0
    %78 = vmatpush1.bf16.xpose.msra.mxu0 0
    %79 = vmatprep.mubr.bf16.mxu0 %v40
    %80 = vmatmul.mubr.bf16.gmra.mrb[0].mxu0 %v39
    %v81 = vpop.f32.mrb[0].mxu0
    %v82 = vadd.f32 %v45, %v81
    %v83 = vpop.f32.mrb[0].mxu0
    %v84 = vpop.f32.mrb[0].mxu0
    %v85 = vpop.f32.mrb[0].mxu0
    %86 = vdwg.mxu0
    %v88 = vrot.slane %v82, 1
    %v90 = vmax.f32 %v82, %v88
    %v91 = vrot.slane %v82, 2
    %v93 = vmax.f32 %v90, %v91
    %v94 = vsub.f32 %v82, %v93
    %v95 = vmul.f32 %v94, 1.442695
    %v96 = vpow.pop %v95
    %v98 = vrot.slane %v93, 7
    %v100 = vsub.f32 %v82, %v98
    %v101 = vmul.f32 %v100, 1.442695
    %v102 = vpow.pop %v101
    %v103 = vrot.slane %v93, 6
    %v105 = vsub.f32 %v82, %v103
    %v106 = vmul.f32 %v105, 1.442695
    %v107 = vpow.pop %v106
    %v109 = vrot.slane %v102, 1
    %v111 = vadd.f32 %v96, %v109
    %v113 = vrot.slane %v107, 2
    %v115 = vadd.f32 %v111, %v113
    %v116 = vlog2.pop %v115
    %v117 = vmul.f32 %v116, 0.6931472
    %v118 = vsub.f32 %v94, %v117
    %v120 = vrot.slane %v117, 7
    %v122 = vsub.f32 %v100, %v120
    %v123 = vrot.slane %v117, 6
    %v125 = vsub.f32 %v105, %v123
    %v126 = vld [vmem:[%s3] sm:$0x1]
    %v127 = vmul.f32 %v126, %v115
    %vm128 = vcmp.ge.f32.partialorder %v127, %v96
    %v129 = vsel %vm128, 1, 0
    %vm130 = vcmp.ge.f32.partialorder %v127, %v111
    %v131 = vsel %vm130, 1, 0
    %v132 = vadd.s32 %v129, %v131
    %vm133 = vcmp.eq.s32.totalorder %v132, 0
    %vm134 = vcmp.eq.s32.totalorder %v132, 1
    %v137 = vunpack.c.l.s4 1966171168
    %v138 = vunpack.c.0.s8 %v137
    %v139 = vlaneseq
    %v140 = vshrl.u32 %v139, 7
    %v141 = vsub.s32 %v138, %v140
    %v142 = vrot.slane %v122, %v141
    %v143 = vcombine.high %v142, %v142
    %v145 = vunpack.c.l.s4 1966171168
    %v146 = vunpack.c.0.s8 %v145
    %v147 = vlaneseq
    %v148 = vshrl.u32 %v147, 7
    %v149 = vsub.s32 %v146, %v148
    %v150 = vrot.slane %v143, %v149
    %v154 = vunpack.c.l.s4 1966171168
    %v155 = vunpack.c.0.s8 %v154
    %v156 = vlaneseq
    %v157 = vshrl.u32 %v156, 7
    %v158 = vsub.s32 %v155, %v157
    %v159 = vrot.slane %v125, %v158
    %v161 = vunpack.c.l.s4 1966171168
    %v162 = vunpack.c.0.s8 %v161
    %v163 = vlaneseq
    %v164 = vshrl.u32 %v163, 7
    %v165 = vsub.s32 %v162, %v164
    %v166 = vrot.slane %v159, %v165
    %v167 = vcombine.high %v166, %v166
    %v169 = vsel %vm134, %v150, %v167
    %v170 = vsel %vm133, %v118, %v169
    %v171 = vsub.s32 %v132, 1
    %v172 = vcvt.s32.f32 %v171
    %v174 = vlaneseq
    %v175 = vshrl.u32 %v174, 7
    %v176 = vsub.s32 0, %v175
    %v177 = vrot.slane %v172, %v176
    %vm179 = vcmask 1040384
    %v180 = vsel %vm179, %v170, %v177
    %vm181 = vcmask 58368
    %182 = vst.msk [vmem:[#allocation5] sm:$0x3] %vm181, %v180
    // Predicated region
    $region22: #{tpu_custom_call.1} parent=1 // pred_check
      _
    $region23: #{tpu_custom_call.1} parent=1 // pred_check_branch
      %184 = sbr.rel (0) target = $region25
    $region24: #{tpu_custom_call.1} parent=1 // pred_region
      %s186 = ssub.s32 32, 32
      %187 = vsyncadd [#allocation4], %s186
      %s189 = sshll.u32 [#allocation5], 4
      %s190 = int_to_ptr.vmem [resolvable:$true] %s189
      %192 = dma.vmem_to_hbm [thread:$0]  %s190, 32, %s4, [#allocation4]
    $region25: #{tpu_custom_call.1} parent=1 // pred_fallthru
      _
    // Predicated region
    $region26: #{tpu_custom_call.1} parent=1 // pred_check
      _
    $region27: #{tpu_custom_call.1} parent=1 // pred_check_branch
      %194 = sbr.rel (0) target = $region29
    $region28: #{tpu_custom_call.1} parent=1 // pred_region
      %195 = dma.done [#allocation4], 32
    $region29: #{tpu_custom_call.1} parent=1 // pred_fallthru
      _
    %196 = vsyncpa [#allocation3], 1
    %197 = vsyncpa [#allocation4], 1

</llo_original>
